<compile_context>
chip_gen: v6e
topology: v6e:2x2x1
jax: 0.10.0
libtpu: 0.0.40
codegen_flags: <defaults>
</compile_context>

<pallas_src>
import jax
import jax.numpy as jnp
from jax.experimental import pallas as pl
from jax.experimental.pallas import tpu as pltpu

MEAN = (0.485, 0.456, 0.406)
STD = (0.229, 0.224, 0.225)

# Compile-time folded scalar constants: (x - mean) / std == x * inv_std + bias.
_INV_STD = tuple(float(1.0 / s) for s in STD)
_BIAS = tuple(float(-m / s) for m, s in zip(MEAN, STD))

_LANE = 128
_SUBLANE = 8


def _normalize_kernel(x_ref, o_ref):
    # x_ref: (B, R, 128) single-channel tile; o_ref: (B, 3, R, 128).
    xv = x_ref[...].astype(jnp.float32)
    # Unrolled per-channel scalar multiply-adds: no captured vector constants,
    # no sublane broadcast, and each store is a dense (B, R, 128) slab.
    for c in range(3):
        o_ref[:, c, :, :] = (xv * _INV_STD[c] + _BIAS[c]).astype(o_ref.dtype)


def _vmem_capacity_bytes():
    try:
        return int(pltpu.get_tpu_info().vmem_capacity_bytes)
    except Exception:
        return 64 * 1024 * 1024  # conservative default (v7x per-core VMEM)


def classifier_inputs(x):
    """x: (N, 1, H, W) -> (N, 3, H, W) float32, (x - mean[c]) / std[c]."""
    n, cin, h, w = x.shape
    assert cin == 1, "expand([-1, 3, -1, -1]) requires channel dim of size 1"
    s = h * w

    # Pad the flattened spatial axis to a lane multiple so every block is a
    # dense (R, 128) slab (unmasked full-width loads/stores).
    s_pad = pl.cdiv(s, _LANE) * _LANE
    r_total = s_pad // _LANE

    x_flat = x.reshape(n, s)
    if s_pad != s:
        # TODO(synk): ragged spatial sizes pay one extra HBM pass for the pad.
        x_flat = jnp.pad(x_flat, ((0, 0), (0, s_pad - s)))
    x_rows = x_flat.reshape(n, r_total, _LANE)

    # --- generation-aware tile sizing -------------------------------------
    in_itemsize = jnp.dtype(x_rows.dtype).itemsize
    vmem_cap = _vmem_capacity_bytes()
    # Per-(row of 128) VMEM bytes: input + 3 f32 output channels, x2 for the
    # double-buffered pipeline. Budget ~1/4 of physical VMEM per step.
    row_bytes_db = 2 * _LANE * (in_itemsize + 3 * 4)
    rows_budget = max(_SUBLANE, (vmem_cap // 4) // row_bytes_db)

    if r_total >= rows_budget:
        # Large images: tile the row axis within one image.
        b_blk = 1
        r_blk = max(_SUBLANE, (rows_budget // _SUBLANE) * _SUBLANE)
    else:
        # Small images: full spatial extent per step, block over the batch so
        # each step still moves multiple MiB of HBM traffic.
        r_blk = r_total
        b_blk = max(1, min(n, rows_budget // max(r_total, 1)))

    # Ensure >= 2 grid steps when possible so both v7x TensorCores get work.
    if pl.cdiv(n, b_blk) * pl.cdiv(r_total, r_blk) < 2:
        if n >= 2:
            b_blk = pl.cdiv(n, 2)
        elif r_total >= 2 * _SUBLANE:
            r_blk = pl.cdiv(pl.cdiv(r_total, 2), _SUBLANE) * _SUBLANE

    grid = (pl.cdiv(n, b_blk), pl.cdiv(r_total, r_blk))

    # Raise the scoped-VMEM limit to comfortably hold the double-buffered step.
    step_vmem = 2 * b_blk * r_blk * _LANE * (in_itemsize + 3 * 4)
    vmem_limit = min(
        vmem_cap,
        max(32 << 20, min(int(vmem_cap * 0.75), step_vmem + (16 << 20))),
    )

    cost = pl.CostEstimate(
        flops=6 * n * s_pad,  # 3 channels x (1 mul + 1 add) per element
        transcendentals=0,
        bytes_accessed=n * s_pad * in_itemsize + n * 3 * s_pad * 4,
    )

    out_rows = pl.pallas_call(
        _normalize_kernel,
        out_shape=jax.ShapeDtypeStruct((n, 3, r_total, _LANE), jnp.float32),
        grid=grid,
        in_specs=[
            pl.BlockSpec((b_blk, r_blk, _LANE), lambda i, j: (i, j, 0)),
        ],
        out_specs=pl.BlockSpec((b_blk, 3, r_blk, _LANE), lambda i, j: (i, 0, j, 0)),
        compiler_params=pltpu.CompilerParams(
            dimension_semantics=("parallel", "parallel"),
            vmem_limit_bytes=int(vmem_limit),
        ),
        cost_estimate=cost,
    )(x_rows)

    out = out_rows.reshape(n, 3, s_pad)
    if s_pad != s:
        out = out[:, :, :s]
    return out.reshape(n, 3, h, w)


if __name__ == "__main__":
    key = jax.random.PRNGKey(0)
    # Small grayscale-style input consistent with expand([-1, 3, -1, -1]).
    x = jax.random.normal(key, (2, 1, 16, 16), dtype=jnp.float32)

    out = jax.block_until_ready(classifier_inputs(x))

    # Reference in plain JAX, matching the PyTorch formula ((x - mean) / std).
    mean = jnp.asarray(MEAN, jnp.float32).reshape(1, 3, 1, 1)
    std = jnp.asarray(STD, jnp.float32).reshape(1, 3, 1, 1)
    ref = (jnp.broadcast_to(x, (2, 3, 16, 16)) - mean) / std

    assert out.shape == (2, 3, 16, 16)
    # Kernel uses folded scale+bias (multiply by 1/std), so allow a few ULP
    # of rounding difference vs the division reference.
    assert jnp.allclose(out, ref, rtol=1e-5, atol=1e-5), float(
        jnp.max(jnp.abs(out - ref))
    )

    print("KERNEL_OK")
</pallas_src>

<mosaic_0001>
module attributes {stable_mosaic.version = 11 : i64} {
  func.func @_normalize_kernel(%arg0: i32, %arg1: i32, %arg2: memref<1x2x128xf32, #tpu.memory_space<vmem>>, %arg3: memref<1x3x2x128xf32, #tpu.memory_space<vmem>>) attributes {dimension_semantics = [#tpu.dimension_semantics<parallel>, #tpu.dimension_semantics<parallel>], iteration_bounds = array<i64: 2, 1>, scalar_prefetch = 0 : i64, scratch_operands = 0 : i64, tpu.core_type = #tpu.core_type<tc>, window_params = [{transform_indices = @transform_0, window_bounds = array<i64: 1, 2, 128>}, {transform_indices = @transform_1, window_bounds = array<i64: 1, 3, 2, 128>}]} {
    %c0 = arith.constant 0 : index
    %c0_0 = arith.constant 0 : index
    %c0_1 = arith.constant 0 : index
    %0 = vector.load %arg2[%c0, %c0_0, %c0_1] : memref<1x2x128xf32, #tpu.memory_space<vmem>>, vector<1x2x128xf32>
    %cst = arith.constant 4.36681223 : f32
    %1 = vector.broadcast %cst : f32 to vector<1x2x128xf32>
    %2 = arith.mulf %0, %1 : vector<1x2x128xf32>
    %cst_2 = arith.constant -2.11790395 : f32
    %3 = vector.broadcast %cst_2 : f32 to vector<1x2x128xf32>
    %4 = arith.addf %2, %3 : vector<1x2x128xf32>
    %c0_3 = arith.constant 0 : index
    %c0_4 = arith.constant 0 : index
    %c0_5 = arith.constant 0 : index
    %c0_6 = arith.constant 0 : index
    %5 = vector.load %arg3[%c0_3, %c0_4, %c0_5, %c0_6] : memref<1x3x2x128xf32, #tpu.memory_space<vmem>>, vector<1x1x2x128xf32>
    %6 = vector.shape_cast %5 : vector<1x1x2x128xf32> to vector<1x2x128xf32>
    %7 = vector.shape_cast %4 : vector<1x2x128xf32> to vector<1x1x2x128xf32>
    tpu.vector_store %arg3[%c0_3, %c0_4, %c0_5, %c0_6], %7 {strides = array<i32>} : memref<1x3x2x128xf32, #tpu.memory_space<vmem>>, vector<1x1x2x128xf32>,
    %cst_7 = arith.constant 4.46428585 : f32
    %8 = vector.broadcast %cst_7 : f32 to vector<1x2x128xf32>
    %9 = arith.mulf %0, %8 : vector<1x2x128xf32>
    %cst_8 = arith.constant -2.03571439 : f32
    %10 = vector.broadcast %cst_8 : f32 to vector<1x2x128xf32>
    %11 = arith.addf %9, %10 : vector<1x2x128xf32>
    %c0_9 = arith.constant 0 : index
    %c1 = arith.constant 1 : index
    %c0_10 = arith.constant 0 : index
    %c0_11 = arith.constant 0 : index
    %12 = vector.load %arg3[%c0_9, %c1, %c0_10, %c0_11] : memref<1x3x2x128xf32, #tpu.memory_space<vmem>>, vector<1x1x2x128xf32>
    %13 = vector.shape_cast %12 : vector<1x1x2x128xf32> to vector<1x2x128xf32>
    %14 = vector.shape_cast %11 : vector<1x2x128xf32> to vector<1x1x2x128xf32>
    tpu.vector_store %arg3[%c0_9, %c1, %c0_10, %c0_11], %14 {strides = array<i32>} : memref<1x3x2x128xf32, #tpu.memory_space<vmem>>, vector<1x1x2x128xf32>,
    %cst_12 = arith.constant 4.44444466 : f32
    %15 = vector.broadcast %cst_12 : f32 to vector<1x2x128xf32>
    %16 = arith.mulf %0, %15 : vector<1x2x128xf32>
    %cst_13 = arith.constant -1.80444443 : f32
    %17 = vector.broadcast %cst_13 : f32 to vector<1x2x128xf32>
    %18 = arith.addf %16, %17 : vector<1x2x128xf32>
    %c0_14 = arith.constant 0 : index
    %c2 = arith.constant 2 : index
    %c0_15 = arith.constant 0 : index
    %c0_16 = arith.constant 0 : index
    %19 = vector.load %arg3[%c0_14, %c2, %c0_15, %c0_16] : memref<1x3x2x128xf32, #tpu.memory_space<vmem>>, vector<1x1x2x128xf32>
    %20 = vector.shape_cast %19 : vector<1x1x2x128xf32> to vector<1x2x128xf32>
    %21 = vector.shape_cast %18 : vector<1x2x128xf32> to vector<1x1x2x128xf32>
    tpu.vector_store %arg3[%c0_14, %c2, %c0_15, %c0_16], %21 {strides = array<i32>} : memref<1x3x2x128xf32, #tpu.memory_space<vmem>>, vector<1x1x2x128xf32>,
    return
  }
  func.func @transform_0(%arg0: i32, %arg1: i32) -> (i32, i32, i32) {
    %c0_i32 = arith.constant 0 : i32
    %c0_i32_0 = arith.constant 0 : i32
    return %arg0, %arg1, %c0_i32 : i32, i32, i32
  }
  func.func @transform_1(%arg0: i32, %arg1: i32) -> (i32, i32, i32, i32) {
    %c0_i32 = arith.constant 0 : i32
    %c0_i32_0 = arith.constant 0 : i32
    %c0_i32_1 = arith.constant 0 : i32
    return %arg0, %c0_i32, %arg1, %c0_i32_0 : i32, i32, i32, i32
  }
}

</mosaic_0001>

<llo_original>
// kernel: tpu_custom_call.1
$region0: #{tpu_custom_call.1}
  #allocation0 [shape = 'u32[]', space=smem, size = 0x4, offset = 0x4, fixed_abs, tag = 'smem constant byte address 0x4 - core index']
  #allocation1 [shape = 'u32[144,128]{1,0:T(1,128)}', space=vmem, size = 0x12000, scoped, tag = 'internal scratch']
  %s0 = inlined_call_operand.hbm [shape: f32[2,2,128], index: 0, kind: input, shape index: {}]
  %s1 = inlined_call_operand.hbm [shape: f32[2,3,2,128], index: 1, kind: output, shape index: {}]
  %s2 = sld [smem:[#allocation0]]
  $region41: #{tpu_custom_call.1} parent=0
    _
  %s4 = ssub.s32 1, %s2
  %s5 = scalar_select 0, %s4, %s2
  $region1: #{tpu_custom_call.1} parent=0
    #allocation2 [shape = 'u8[2048]{0}', space=vmem, size = 0x800, scoped, tag = 'input window, operand 0']
    #allocation3 [shape = 's32[2]{0}', space=sflag, size = 0x8, scoped, tag = 'scoped memory for tpu_custom_call.1']
    #allocation4 [shape = 's32[2]{0}', space=sflag, size = 0x8, scoped, tag = 'scoped memory for tpu_custom_call.1']
    #allocation5 [shape = 'u8[6144]{0}', space=vmem, size = 0x1800, scoped, tag = 'output window, operand 0']
    %6 = vsyncpa [#allocation3], 0
    %s7 = scalar_lea.sflag [#allocation3], 1
    %8 = vsyncpa %s7, 0
    %9 = vsyncpa [#allocation4], 0
    %s10 = scalar_lea.sflag [#allocation4], 1
    %11 = vsyncpa %s10, 0
    loop: start=0, step=1, limit=4
    $region2: #{tpu_custom_call.1} parent=1 // loop_pre_header
      _
    $region3: #{tpu_custom_call.1} parent=1 // loop_header
      %s13 = sphi 0, %s17
      %p14 = scmp.ge.s32.totalorder %s13, 4
      %s20 = sphi 0, %s32
      %s21 = sphi 0, %s28
      %s22 = sphi 0, %s20
      %s23 = sphi 0, %s21
      %s24 = sphi 0, %s22
      %s25 = sphi 0, %s23
      %s37 = sphi 0, %s39
      %s40 = sphi 0, %s37
      %s41 = sphi 0, %s40
      %s57 = sphi 0, %s41
      %s65 = sphi 0, %s67
      %s68 = sphi 0, %s65
      %s69 = sphi 0, %s68
      %s85 = sphi 0, %s69
    $region4: #{tpu_custom_call.1} parent=1 // loop_header_branch
      %16 = sbr.rel (%p14) target = $region8
    $region5: #{tpu_custom_call.1} parent=1 // loop_body
      %s18 = ssub.s32 %s13, 1
      %s19 = ssub.s32 %s13, 2
      %s26 = sadd.s32 1, %s21
      %p27 = scmp.ge.s32.totalorder %s26, 1
      %s28 = scalar_select %p27, 0, %s26
      %s29 = sadd.s32 1, %s20
      %s30 = scalar_select %p27, %s29, %s20
      %p31 = scmp.ge.s32.totalorder %s30, 2
      %s32 = scalar_select %p31, 0, %s30
      %s33 = ssub.s32 %s20, %s32
      %s34 = ssub.s32 %s21, %s28
      %s35 = sor.u32 %s33, %s34
      %p36 = scmp.eq.s32.totalorder %s35, 0
      %s38 = sadd.s32 %s37, 1
      %s39 = scalar_select %p36, %s37, %s38
      %p42 = pneg %p36
      %p43 = scmp.eq.s32.totalorder %s13, 1
      %p44 = por %p42, %p43
      %p45 = scmp.ne.s32.totalorder %s37, %s40
      %p46 = scmp.eq.s32.totalorder %s13, 0
      %p47 = por %p45, %p46
      %p48 = scmp.ne.s32.totalorder %s37, %s40
      %p49 = scmp.eq.s32.totalorder %s18, 1
      %p50 = por %p48, %p49
      %p51 = scmp.ne.s32.totalorder %s40, %s41
      %p52 = scmp.eq.s32.totalorder %s18, 0
      %p53 = por %p51, %p52
      %p54 = scmp.ne.s32.totalorder %s40, %s41
      %p55 = scmp.eq.s32.totalorder %s19, 1
      %p56 = por %p54, %p55
      %p58 = scmp.ne.s32.totalorder %s41, %s57
      %p59 = scmp.eq.s32.totalorder %s19, 0
      %p60 = por %p58, %p59
      %s61 = ssub.s32 %s20, %s32
      %s62 = ssub.s32 %s21, %s28
      %s63 = sor.u32 %s61, %s62
      %p64 = scmp.eq.s32.totalorder %s63, 0
      %s66 = sadd.s32 %s65, 1
      %s67 = scalar_select %p64, %s65, %s66
      %p70 = pneg %p64
      %p71 = scmp.eq.s32.totalorder %s13, 1
      %p72 = por %p70, %p71
      %p73 = scmp.ne.s32.totalorder %s65, %s68
      %p74 = scmp.eq.s32.totalorder %s13, 0
      %p75 = por %p73, %p74
      %p76 = scmp.ne.s32.totalorder %s65, %s68
      %p77 = scmp.eq.s32.totalorder %s18, 1
      %p78 = por %p76, %p77
      %p79 = scmp.ne.s32.totalorder %s68, %s69
      %p80 = scmp.eq.s32.totalorder %s18, 0
      %p81 = por %p79, %p80
      %p82 = scmp.ne.s32.totalorder %s68, %s69
      %p83 = scmp.eq.s32.totalorder %s19, 1
      %p84 = por %p82, %p83
      %p86 = scmp.ne.s32.totalorder %s69, %s85
      %p87 = scmp.eq.s32.totalorder %s19, 0
      %p88 = por %p86, %p87
      %p89 = scmp.le.s32.totalorder 1, %s13
      %p90 = scmp.lt.s32.totalorder %s13, 3
      %p91 = pnand %p89, %p90
      %p92 = pneg %p91
      // Predicated region
      $region9: #{tpu_custom_call.1} parent=5 // pred_check
        _
      $region10: #{tpu_custom_call.1} parent=5 // pred_check_branch
        %94 = sbr.rel (%p91) target = $region12
      $region11: #{tpu_custom_call.1} parent=5 // pred_region
        %s95 = ssub.s32 %s13, 1
      $region12: #{tpu_custom_call.1} parent=5 // pred_fallthru
        _
      %p96 = scmp.lt.s32.totalorder %s13, 2
      // Predicated region
      $region13: #{tpu_custom_call.1} parent=5 // pred_check
        %p97 = pneg %p96
      $region14: #{tpu_custom_call.1} parent=5 // pred_check_branch
        %99 = sbr.rel (%p97) target = $region16
      $region15: #{tpu_custom_call.1} parent=5 // pred_region
        // Predicated region
        $region17: #{tpu_custom_call.1} parent=15 // pred_check
          %p100 = pneg %p47
        $region18: #{tpu_custom_call.1} parent=15 // pred_check_branch
          %102 = sbr.rel (%p100) target = $region20
        $region19: #{tpu_custom_call.1} parent=15 // pred_region
          %s103 = sand.u32 %s37, 1
          %s104 = scalar_lea.sflag [#allocation3], %s103
          %s105 = sand.u32 %s37, 1
          %s106 = smul.addr %s105, 2
          %s107 = scalar_lea.vmem [#allocation2], %s106
          %s109 = ssub.s32 32, 32
          %110 = vsyncadd %s104, %s109
          %s111 = sadd.s32 %s21, %s20
          %s112 = smul.addr %s111, 32
          %s113 = scalar_lea.hbm %s0, %s112
          %s115 = sshll.u32 %s107, 4
          %s116 = int_to_ptr.vmem [resolvable:$true] %s115
          %118 = dma.hbm_to_vmem [thread:$0]  %s113, 32, %s116, %s104
        $region20: #{tpu_custom_call.1} parent=15 // pred_fallthru
          _
      $region16: #{tpu_custom_call.1} parent=5 // pred_fallthru
        _
      %p119 = scmp.le.s32.totalorder 1, %s13
      %p120 = scmp.lt.s32.totalorder %s13, 3
      %p121 = pnand %p119, %p120
      %p122 = pneg %p121
      // Predicated region
      $region21: #{tpu_custom_call.1} parent=5 // pred_check
        _
      $region22: #{tpu_custom_call.1} parent=5 // pred_check_branch
        %124 = sbr.rel (%p121) target = $region24
      $region23: #{tpu_custom_call.1} parent=5 // pred_region
        %s125 = ssub.s32 %s13, 1
        %s126 = sand.u32 %s40, 1
        %s127 = scalar_lea.sflag [#allocation3], %s126
        %s128 = sand.u32 %s40, 1
        %s129 = smul.addr %s128, 2
        %s130 = scalar_lea.vmem [#allocation2], %s129
        // Predicated region
        $region25: #{tpu_custom_call.1} parent=23 // pred_check
          %p131 = pneg %p53
        $region26: #{tpu_custom_call.1} parent=23 // pred_check_branch
          %133 = sbr.rel (%p131) target = $region28
        $region27: #{tpu_custom_call.1} parent=23 // pred_region
          %134 = dma.done %s127, 32
        $region28: #{tpu_custom_call.1} parent=23 // pred_fallthru
          _
        %s135 = sand.u32 %s40, 1
        %s136 = scalar_lea.sflag [#allocation3], %s135
        %s137 = sand.u32 %s40, 1
        %s138 = smul.addr %s137, 2
        %s139 = scalar_lea.vmem [#allocation2], %s138
        %p140 = pneg %p53
        %p141 = pneg %p50
        %p142 = pneg %p81
        %p143 = pneg %p78
        %s144 = sand.u32 %s68, 1
        %s145 = scalar_lea.sflag [#allocation4], %s144
        %s146 = sand.u32 %s68, 1
        %s147 = smul.addr %s146, 6
        %s148 = scalar_lea.vmem [#allocation5], %s147
        %v149 = vld [vmem:[%s130] sm:$0x3]
        %v150 = vmul.f32 %v149, 4.366812
        %v151 = vadd.f32 %v150, -2.117904
        %152 = vst [vmem:[%s148] sm:$0x3] %v151
        %v153 = vmul.f32 %v149, 4.464286
        %v154 = vadd.f32 %v153, -2.0357144
        %s155 = scalar_lea.vmem %s148, 2 [#allocation5]
        %156 = vst [vmem:[%s155] sm:$0x3] %v154
        %v157 = vmul.f32 %v149, 4.4444447
        %v158 = vadd.f32 %v157, -1.8044444
        %s159 = scalar_lea.vmem %s148, 4 [#allocation5]
        %160 = vst [vmem:[%s159] sm:$0x3] %v158
        %s161 = sand.u32 %s68, 1
        %s162 = scalar_lea.sflag [#allocation4], %s161
        %s163 = sand.u32 %s68, 1
        %s164 = smul.addr %s163, 6
        %s165 = scalar_lea.vmem [#allocation5], %s164
        // Predicated region
        $region29: #{tpu_custom_call.1} parent=23 // pred_check
          %p166 = pneg %p78
        $region30: #{tpu_custom_call.1} parent=23 // pred_check_branch
          %168 = sbr.rel (%p166) target = $region32
        $region31: #{tpu_custom_call.1} parent=23 // pred_region
          %s170 = ssub.s32 96, 96
          %171 = vsyncadd %s162, %s170
          %s172 = smul.addr %s22, 3
          %s173 = sadd.s32 %s23, %s172
          %s174 = smul.addr %s173, 32
          %s175 = scalar_lea.hbm %s1, %s174
          %s176 = sshll.u32 %s165, 4
          %s177 = int_to_ptr.vmem [resolvable:$true] %s176
          %182 = dma.vmem_to_hbm [thread:$0]  %s177, 96, %s175, %s162, 32, 32, 2
        $region32: #{tpu_custom_call.1} parent=23 // pred_fallthru
          _
      $region24: #{tpu_custom_call.1} parent=5 // pred_fallthru
        _
      %p183 = scmp.le.s32.totalorder 2, %s13
      // Predicated region
      $region33: #{tpu_custom_call.1} parent=5 // pred_check
        %p184 = pneg %p183
      $region34: #{tpu_custom_call.1} parent=5 // pred_check_branch
        %186 = sbr.rel (%p184) target = $region36
      $region35: #{tpu_custom_call.1} parent=5 // pred_region
        %s187 = ssub.s32 %s13, 2
        // Predicated region
        $region37: #{tpu_custom_call.1} parent=35 // pred_check
          %p188 = pneg %p84
        $region38: #{tpu_custom_call.1} parent=35 // pred_check_branch
          %190 = sbr.rel (%p188) target = $region40
        $region39: #{tpu_custom_call.1} parent=35 // pred_region
          %s191 = sand.u32 %s69, 1
          %s192 = scalar_lea.sflag [#allocation4], %s191
          %s193 = sand.u32 %s69, 1
          %s194 = smul.addr %s193, 6
          %s195 = scalar_lea.vmem [#allocation5], %s194
          %196 = dma.done %s192, 96
        $region40: #{tpu_custom_call.1} parent=35 // pred_fallthru
          _
      $region36: #{tpu_custom_call.1} parent=5 // pred_fallthru
        _
    $region6: #{tpu_custom_call.1} parent=1 // loop_footer
      %s17 = sadd.s32 1, %s13
    $region7: #{tpu_custom_call.1} parent=1 // loop_footer_branch
      %12 = sbr.rel target = $region3
    $region8: #{tpu_custom_call.1} parent=1 // loop_exit
      _
    %197 = vsyncpa [#allocation3], 1
    %s198 = scalar_lea.sflag [#allocation3], 1
    %199 = vsyncpa %s198, 1
    %200 = vsyncpa [#allocation4], 1
    %s201 = scalar_lea.sflag [#allocation4], 1
    %202 = vsyncpa %s201, 1

</llo_original>
